<compile_context>
chip_gen: v6e
topology: v6e:2x2x1
jax: 0.10.0
libtpu: 0.0.40
codegen_flags: <defaults>
</compile_context>

<pallas_src>
import jax
import jax.numpy as jnp
from jax.experimental import pallas as pl
from jax.experimental.pallas import tpu as pltpu


def mlp_kernel(x_ref, w1t_ref, b1_ref, w2_ref, b2_ref, oT_ref):
    x = x_ref[...]                                           # (TILE_B, D) natural layout
    # fc1 on the MXU, batch mapped to the lanes of the result:
    #   (H, D) . (TILE_B, D) contracting D of both  ->  (H, TILE_B)
    hT = jax.lax.dot_general(
        w1t_ref[...], x,
        dimension_numbers=(((1,), (1,)), ((), ())),
        preferred_element_type=jnp.float32,
    )                                                        # (H, TILE_B)
    hT = jnp.maximum(hT + b1_ref[...], 0.0)                  # b1 (H,1) broadcasts over lanes
    # fc2 (N = 1) as a VPU reduction over the H=16 hidden rows; MXU stays free.
    z = jnp.sum(hT * w2_ref[...], axis=0, keepdims=True) + b2_ref[...]   # (1, TILE_B)
    oT_ref[...] = jax.nn.sigmoid(z).astype(oT_ref.dtype)


def simple_nn_forward(x, w1, b1, w2, b2, *, max_tile_b=8192):
    """x: (B, D) f32; w1: (D, H); b1: (H,); w2: (H, 1); b2: (1,) -> (B, 1) f32."""
    B, D = x.shape
    H = w1.shape[1]

    # Tile the batch. Small batches use a single full block (block dim == array
    # dim satisfies the (8,128) tiling rule); large batches use lane-aligned
    # 8192-row tiles (multiple of 8 and 128). Ragged last blocks are handled by
    # Pallas (reads padded / writes masked) and any extra rows are never
    # observed because the output array is exactly (1, B).
    tb = B if B <= max_tile_b else max_tile_b
    grid = (pl.cdiv(B, tb),)

    # Tiny parameter layouts: hidden on sublanes, broadcast over lanes.
    w1t = jnp.transpose(w1)              # (H, D)
    b1c = jnp.reshape(b1, (H, 1))
    w2c = jnp.reshape(w2, (H, 1))
    b2c = jnp.reshape(b2, (1, 1))

    full = lambda i: (0, 0)              # resident weight / bias blocks

    oT = pl.pallas_call(
        mlp_kernel,
        out_shape=jax.ShapeDtypeStruct((1, B), jnp.float32),
        grid=grid,
        in_specs=[
            pl.BlockSpec((tb, D), lambda i: (i, 0)),         # x tile, natural layout
            pl.BlockSpec((H, D), full),                      # w1^T
            pl.BlockSpec((H, 1), full),                      # b1
            pl.BlockSpec((H, 1), full),                      # w2
            pl.BlockSpec((1, 1), full),                      # b2
        ],
        out_specs=pl.BlockSpec((1, tb), lambda i: (0, i)),   # lane-dense output slab
        compiler_params=pltpu.CompilerParams(
            dimension_semantics=("parallel",),
        ),
    )(x, w1t, b1c, w2c, b2c)

    # Back to the PyTorch output layout (B, 1) — a tiny (4*B byte) reshuffle.
    return jnp.transpose(oT)


def init_params(key, input_size, hidden=16, out=1):
    # Deterministic init mirroring nn.Linear's default U(-1/sqrt(fan_in), 1/sqrt(fan_in)).
    k1, k2, k3, k4 = jax.random.split(key, 4)
    lim1 = 1.0 / jnp.sqrt(jnp.float32(input_size))
    lim2 = 1.0 / jnp.sqrt(jnp.float32(hidden))
    w1 = jax.random.uniform(k1, (input_size, hidden), jnp.float32, -lim1, lim1)
    b1 = jax.random.uniform(k2, (hidden,), jnp.float32, -lim1, lim1)
    w2 = jax.random.uniform(k3, (hidden, out), jnp.float32, -lim2, lim2)
    b2 = jax.random.uniform(k4, (out,), jnp.float32, -lim2, lim2)
    return w1, b1, w2, b2


def _ref_forward(x, w1, b1, w2, b2):
    return jax.nn.sigmoid(jnp.maximum(x @ w1 + b1[None, :], 0.0) @ w2 + b2[None, :])


if __name__ == "__main__":
    key = jax.random.PRNGKey(0)
    kx, kp, kx2 = jax.random.split(key, 3)

    # Small shapes consistent with the module: batch=8, input_size=32, hidden=16, out=1.
    batch, input_size = 8, 32
    x = jax.random.normal(kx, (batch, input_size), jnp.float32)
    w1, b1, w2, b2 = init_params(kp, input_size)

    fwd = jax.jit(simple_nn_forward, static_argnames=("max_tile_b",))
    out = jax.block_until_ready(fwd(x, w1, b1, w2, b2))
    ref = _ref_forward(x, w1, b1, w2, b2)
    assert out.shape == (batch, 1)
    assert jnp.allclose(out, ref, atol=1e-5, rtol=1e-5)

    # Exercise the multi-tile path (4 grid steps, resident weights) at a small size.
    x2 = jax.random.normal(kx2, (512, input_size), jnp.float32)
    out2 = jax.block_until_ready(fwd(x2, w1, b1, w2, b2, max_tile_b=128))
    ref2 = _ref_forward(x2, w1, b1, w2, b2)
    assert out2.shape == (512, 1)
    assert jnp.allclose(out2, ref2, atol=1e-5, rtol=1e-5)

    print("KERNEL_OK")
</pallas_src>

<mosaic_0001>
module attributes {stable_mosaic.version = 11 : i64} {
  func.func @mlp_kernel(%arg0: i32, %arg1: memref<8x32xf32, #tpu.memory_space<vmem>>, %arg2: memref<16x32xf32, #tpu.memory_space<vmem>>, %arg3: memref<16x1xf32, #tpu.memory_space<vmem>>, %arg4: memref<16x1xf32, #tpu.memory_space<vmem>>, %arg5: memref<1x1xf32, #tpu.memory_space<vmem>>, %arg6: memref<1x8xf32, #tpu.memory_space<vmem>>) attributes {dimension_semantics = [#tpu.dimension_semantics<parallel>], iteration_bounds = array<i64: 1>, scalar_prefetch = 0 : i64, scratch_operands = 0 : i64, tpu.core_type = #tpu.core_type<tc>, window_params = [{transform_indices = @transform_0, window_bounds = array<i64: 8, 32>}, {pipeline_mode = #tpu.pipeline_mode<synchronous>, transform_indices = @transform_1, window_bounds = array<i64: 16, 32>}, {pipeline_mode = #tpu.pipeline_mode<synchronous>, transform_indices = @transform_2, window_bounds = array<i64: 16, 1>}, {pipeline_mode = #tpu.pipeline_mode<synchronous>, transform_indices = @transform_3, window_bounds = array<i64: 16, 1>}, {pipeline_mode = #tpu.pipeline_mode<synchronous>, transform_indices = @transform_4, window_bounds = array<i64: 1, 1>}, {transform_indices = @transform_5, window_bounds = array<i64: 1, 8>}]} {
    %c0 = arith.constant 0 : index
    %c0_0 = arith.constant 0 : index
    %0 = vector.load %arg1[%c0, %c0_0] : memref<8x32xf32, #tpu.memory_space<vmem>>, vector<8x32xf32>
    %c0_1 = arith.constant 0 : index
    %c0_2 = arith.constant 0 : index
    %1 = vector.load %arg2[%c0_1, %c0_2] : memref<16x32xf32, #tpu.memory_space<vmem>>, vector<16x32xf32>
    %cst = arith.constant dense<0.000000e+00> : vector<16x8xf32>
    %2 = tpu.matmul %1, %0, %cst {dimension_numbers = #tpu.dot_dimension_numbers<[1], [1], [0], [0], [0, 0, 1, 0], [], []>} : vector<16x32xf32>, vector<8x32xf32>, vector<16x8xf32> -> vector<16x8xf32>
    %c0_3 = arith.constant 0 : index
    %c0_4 = arith.constant 0 : index
    %3 = vector.load %arg3[%c0_3, %c0_4] : memref<16x1xf32, #tpu.memory_space<vmem>>, vector<16x1xf32>
    %4 = vector.broadcast %3 : vector<16x1xf32> to vector<16x8xf32>
    %5 = arith.addf %2, %4 : vector<16x8xf32>
    %cst_5 = arith.constant 0.000000e+00 : f32
    %6 = vector.broadcast %cst_5 : f32 to vector<16x8xf32>
    %7 = arith.maximumf %5, %6 : vector<16x8xf32>
    %c0_6 = arith.constant 0 : index
    %c0_7 = arith.constant 0 : index
    %8 = vector.load %arg4[%c0_6, %c0_7] : memref<16x1xf32, #tpu.memory_space<vmem>>, vector<16x1xf32>
    %9 = vector.broadcast %8 : vector<16x1xf32> to vector<16x8xf32>
    %10 = arith.mulf %7, %9 : vector<16x8xf32>
    %cst_8 = arith.constant dense<0.000000e+00> : vector<8xf32>
    %11 = vector.multi_reduction <add>, %10, %cst_8 [0] : vector<16x8xf32> to vector<8xf32>
    %12 = vector.shape_cast %11 : vector<8xf32> to vector<1x8xf32>
    %c0_9 = arith.constant 0 : index
    %c0_10 = arith.constant 0 : index
    %13 = vector.load %arg5[%c0_9, %c0_10] : memref<1x1xf32, #tpu.memory_space<vmem>>, vector<1x1xf32>
    %14 = vector.broadcast %13 : vector<1x1xf32> to vector<1x8xf32>
    %15 = arith.addf %12, %14 : vector<1x8xf32>
    %16 = arith.negf %15 : vector<1x8xf32>
    %17 = math.exp %16 : vector<1x8xf32>
    %cst_11 = arith.constant 1.000000e+00 : f32
    %18 = vector.broadcast %cst_11 : f32 to vector<1x8xf32>
    %19 = arith.addf %18, %17 : vector<1x8xf32>
    %20 = arith.divf %18, %19 : vector<1x8xf32>
    %c0_12 = arith.constant 0 : index
    %c0_13 = arith.constant 0 : index
    %21 = vector.load %arg6[%c0_12, %c0_13] : memref<1x8xf32, #tpu.memory_space<vmem>>, vector<1x8xf32>
    tpu.vector_store %arg6[%c0_12, %c0_13], %20 {strides = array<i32>} : memref<1x8xf32, #tpu.memory_space<vmem>>, vector<1x8xf32>,
    return
  }
  func.func @transform_0(%arg0: i32) -> (i32, i32) {
    %c0_i32 = arith.constant 0 : i32
    %c0_i32_0 = arith.constant 0 : i32
    return %arg0, %c0_i32 : i32, i32
  }
  func.func @transform_1(%arg0: i32) -> (i32, i32) {
    %c0_i32 = arith.constant 0 : i32
    %c0_i32_0 = arith.constant 0 : i32
    %c0_i32_1 = arith.constant 0 : i32
    return %c0_i32, %c0_i32_0 : i32, i32
  }
  func.func @transform_2(%arg0: i32) -> (i32, i32) {
    %c0_i32 = arith.constant 0 : i32
    %c0_i32_0 = arith.constant 0 : i32
    %c0_i32_1 = arith.constant 0 : i32
    return %c0_i32, %c0_i32_0 : i32, i32
  }
  func.func @transform_3(%arg0: i32) -> (i32, i32) {
    %c0_i32 = arith.constant 0 : i32
    %c0_i32_0 = arith.constant 0 : i32
    %c0_i32_1 = arith.constant 0 : i32
    return %c0_i32, %c0_i32_0 : i32, i32
  }
  func.func @transform_4(%arg0: i32) -> (i32, i32) {
    %c0_i32 = arith.constant 0 : i32
    %c0_i32_0 = arith.constant 0 : i32
    %c0_i32_1 = arith.constant 0 : i32
    return %c0_i32, %c0_i32_0 : i32, i32
  }
  func.func @transform_5(%arg0: i32) -> (i32, i32) {
    %c0_i32 = arith.constant 0 : i32
    %c0_i32_0 = arith.constant 0 : i32
    return %c0_i32, %arg0 : i32, i32
  }
}

</mosaic_0001>

<llo_original>
// kernel: simple_nn_forward.1
$region0: #{simple_nn_forward.1}
  #allocation0 [shape = 'u32[]', space=smem, size = 0x4, offset = 0x4, fixed_abs, tag = 'smem constant byte address 0x4 - core index']
  #allocation1 [shape = 'u32[144,128]{1,0:T(1,128)}', space=vmem, size = 0x12000, scoped, tag = 'internal scratch']
  #allocation2 [shape = 'f32[1,1]{1,0:T(1,128)S(1)}', space=vmem, size = 0x200, scoped, tag = 'scoped memory for simple_nn_forward.1']
  %s0 = inlined_call_operand.vmem [shape: f32[8,32], index: 0, kind: input, shape index: {}]
  %s1 = inlined_call_operand.vmem [shape: f32[16,32], index: 1, kind: input, shape index: {}]
  %s2 = inlined_call_operand.vmem [shape: f32[16,1], index: 2, kind: input, shape index: {}]
  %s3 = inlined_call_operand.vmem [shape: f32[16,1], index: 3, kind: input, shape index: {}]
  %s4 = inlined_call_operand.<no memory space> [shape: f32[1,1], index: 4, kind: input, shape index: {}]
  %s5 = inlined_call_operand.hbm [shape: f32[1,8], index: 5, kind: output, shape index: {}]
  %s6 = sld [smem:[#allocation0]]
  $region30: #{simple_nn_forward.1} parent=0
    _
  %s8 = ssub.s32 1, %s6
  %s9 = scalar_select 0, %s8, %s6
  %v10 = vstv %s4
  %11 = vst [vmem:[#allocation2] sm:$0x1] %v10
  $region1: #{simple_nn_forward.1} parent=0
    #allocation3 [shape = 'u8[512]{0}', space=vmem, size = 0x400, scoped, tag = 'output window, operand 0, single buffered']
    #allocation4 [shape = 's32[1]{0}', space=sflag, size = 0x4, scoped, tag = 'scoped memory for simple_nn_forward.1']
    %12 = vsyncpa [#allocation4], 0
    // Predicated region
    $region2: #{simple_nn_forward.1} parent=1 // pred_check
      _
    $region3: #{simple_nn_forward.1} parent=1 // pred_check_branch
      %14 = sbr.rel (0) target = $region5
    $region4: #{simple_nn_forward.1} parent=1 // pred_region
      _
    $region5: #{simple_nn_forward.1} parent=1 // pred_fallthru
      _
    // Predicated region
    $region6: #{simple_nn_forward.1} parent=1 // pred_check
      _
    $region7: #{simple_nn_forward.1} parent=1 // pred_check_branch
      %16 = sbr.rel (0) target = $region9
    $region8: #{simple_nn_forward.1} parent=1 // pred_region
      _
    $region9: #{simple_nn_forward.1} parent=1 // pred_fallthru
      _
    // Predicated region
    $region10: #{simple_nn_forward.1} parent=1 // pred_check
      _
    $region11: #{simple_nn_forward.1} parent=1 // pred_check_branch
      %18 = sbr.rel (0) target = $region13
    $region12: #{simple_nn_forward.1} parent=1 // pred_region
      _
    $region13: #{simple_nn_forward.1} parent=1 // pred_fallthru
      _
    // Predicated region
    $region14: #{simple_nn_forward.1} parent=1 // pred_check
      _
    $region15: #{simple_nn_forward.1} parent=1 // pred_check_branch
      %20 = sbr.rel (0) target = $region17
    $region16: #{simple_nn_forward.1} parent=1 // pred_region
      _
    $region17: #{simple_nn_forward.1} parent=1 // pred_fallthru
      _
    // Predicated region
    $region18: #{simple_nn_forward.1} parent=1 // pred_check
      _
    $region19: #{simple_nn_forward.1} parent=1 // pred_check_branch
      %22 = sbr.rel (0) target = $region21
    $region20: #{simple_nn_forward.1} parent=1 // pred_region
      _
    $region21: #{simple_nn_forward.1} parent=1 // pred_fallthru
      _
    %v23 = vld [vmem:[%s0] sm:$0xff]
    %v24 = vld [vmem:[%s1] sm:$0xff]
    %v25 = vld [vmem:[%s1 + $0x8] sm:$0xff]
    %v26 = vld [vmem:[%s2] sm:$0xff]
    %v27 = vld [vmem:[%s2 + $0x8] sm:$0xff]
    %29 = vset.pattern.permute.xlu0 0
    %30 = vperm.xlu0 %29, %v26
    %v31 = vpop.permute.xlu0 %30
    %34 = vset.pattern.permute.xlu0 0
    %35 = vperm.xlu0 %34, %v27
    %v36 = vpop.permute.xlu0 %35
    %vm38 = vcmask 261120
    %v40 = vsel %vm38, %v24, 0
    %v43 = vsel %vm38, %v25, 0
    %v46 = vsel %vm38, %v23, 0
    %48 = vmatprep.subr.mxu0 0.0
    %49 = vmatpush1.xpose.msra.mxu0 0.0
    %50 = vmatprep.subr.mxu0 0.0
    %51 = vmatpush1.xpose.msra.mxu0 0.0
    %52 = vmatprep.subr.mxu0 0.0
    %53 = vmatpush1.xpose.msra.mxu0 0.0
    %54 = vmatprep.subr.mxu0 0.0
    %55 = vmatpush1.xpose.msra.mxu0 0.0
    %56 = vmatprep.subr.mxu0 0.0
    %57 = vmatpush1.xpose.msra.mxu0 0.0
    %58 = vmatprep.subr.mxu0 0.0
    %59 = vmatpush1.xpose.msra.mxu0 0.0
    %60 = vmatprep.subr.mxu0 0.0
    %61 = vmatpush1.xpose.msra.mxu0 0.0
    %62 = vmatprep.subr.mxu0 0.0
    %63 = vmatpush1.xpose.msra.mxu0 0.0
    %64 = vmatprep.subr.mxu0 0.0
    %65 = vmatpush1.xpose.msra.mxu0 0.0
    %66 = vmatprep.subr.mxu0 0.0
    %67 = vmatpush1.xpose.msra.mxu0 0.0
    %68 = vmatprep.subr.mxu0 0.0
    %69 = vmatpush1.xpose.msra.mxu0 0.0
    %70 = vmatprep.subr.mxu0 0.0
    %71 = vmatpush1.xpose.msra.mxu0 0.0
    %72 = vmatprep.subr.mxu0 0.0
    %73 = vmatpush1.xpose.msra.mxu0 0.0
    %74 = vmatprep.subr.mxu0 0.0
    %75 = vmatpush1.xpose.msra.mxu0 0.0
    %76 = vmatprep.subr.mxu0 0.0
    %77 = vmatpush1.xpose.msra.mxu0 0.0
    %78 = vmatprep.subr.mxu0 0.0
    %79 = vmatpush1.xpose.msra.mxu0 %v46
    %80 = vmatprep.subr.mxu0 0.0
    %81 = vmatpush2.xpose.msra.mxu0 0.0
    %82 = vmatprep.subr.mxu0 0.0
    %83 = vmatpush2.xpose.msra.mxu0 0.0
    %84 = vmatprep.subr.mxu0 0.0
    %85 = vmatpush2.xpose.msra.mxu0 0.0
    %86 = vmatprep.subr.mxu0 0.0
    %87 = vmatpush2.xpose.msra.mxu0 0.0
    %88 = vmatprep.subr.mxu0 0.0
    %89 = vmatpush2.xpose.msra.mxu0 0.0
    %90 = vmatprep.subr.mxu0 0.0
    %91 = vmatpush2.xpose.msra.mxu0 0.0
    %92 = vmatprep.subr.mxu0 0.0
    %93 = vmatpush2.xpose.msra.mxu0 0.0
    %94 = vmatprep.subr.mxu0 0.0
    %95 = vmatpush2.xpose.msra.mxu0 0.0
    %96 = vmatprep.subr.mxu0 0.0
    %97 = vmatpush2.xpose.msra.mxu0 0.0
    %98 = vmatprep.subr.mxu0 0.0
    %99 = vmatpush2.xpose.msra.mxu0 0.0
    %100 = vmatprep.subr.mxu0 0.0
    %101 = vmatpush2.xpose.msra.mxu0 0.0
    %102 = vmatprep.subr.mxu0 0.0
    %103 = vmatpush2.xpose.msra.mxu0 0.0
    %104 = vmatprep.subr.mxu0 0.0
    %105 = vmatpush2.xpose.msra.mxu0 0.0
    %106 = vmatprep.subr.mxu0 0.0
    %107 = vmatpush2.xpose.msra.mxu0 0.0
    %108 = vmatprep.subr.mxu0 0.0
    %109 = vmatpush2.xpose.msra.mxu0 0.0
    %110 = vmatprep.subr.mxu0 0.0
    %111 = vmatpush2.xpose.msra.mxu0 0.0
    %112 = vmatprep.mubr.f32.mxu0 0.0
    %113 = vmatmul.mubr.f32.gmra.mxu0 %v40
    %v114 = vpop.f32.mrf.mxu0
    %v115 = vadd.f32 %v31, %v114
    %v116 = vpop.f32.mrf.mxu0
    %117 = vmatprep.mubr.f32.mxu0 0.0
    %118 = vmatmul.mubr.f32.gmra.mxu0 %v43
    %v119 = vpop.f32.mrf.mxu0
    %v120 = vadd.f32 %v36, %v119
    %v121 = vpop.f32.mrf.mxu0
    %122 = vdwg.mxu0
    %v123 = vmax.f32 %v115, 0.0
    %v124 = vmax.f32 %v120, 0.0
    %v125 = vld [vmem:[%s3] sm:$0xff]
    %v126 = vld [vmem:[%s3 + $0x8] sm:$0xff]
    %128 = vset.pattern.permute.xlu0 0
    %129 = vperm.xlu0 %128, %v125
    %v130 = vpop.permute.xlu0 %129
    %133 = vset.pattern.permute.xlu0 0
    %134 = vperm.xlu0 %133, %v126
    %v135 = vpop.permute.xlu0 %134
    %v137 = vmul.f32 %v123, %v130
    %v138 = vmul.f32 %v124, %v135
    %vm139 = vcmask 64512
    %v140 = vsel %vm139, %v137, 0.0
    %v141 = vsel %vm139, %v138, 0.0
    %v142 = vadd.f32 %v140, %v141
    %v143 = vrot.slane %v142, 4
    %v144 = vadd.f32 %v142, %v143
    %v145 = vrot.slane %v144, 2
    %v146 = vadd.f32 %v144, %v145
    %v147 = vrot.slane %v146, 1
    %v148 = vadd.f32 %v146, %v147
    %v149 = vld [vmem:[#allocation2] sm:$0x1]
    %151 = vset.pattern.permute.xlu0 0
    %152 = vperm.xlu0 %151, %v149
    %v153 = vpop.permute.xlu0 %152
    %v155 = vlaneseq
    %v156 = vshrl.u32 %v155, 7
    %v157 = vsub.s32 0, %v156
    %v158 = vrot.slane %v153, %v157
    %v159 = vadd.f32 %v148, %v158
    %v160 = vxor.u32 %v159, 2147483648
    %v161 = vmul.f32 %v160, 1.442695
    %v162 = vpow.pop %v161
    %v163 = vadd.f32 %v162, 1.0
    %v164 = vrcp.pop %v163
    %v165 = vmul.f32 1.0, %v164
    %vm166 = vcmask 57344
    %167 = vst.msk [vmem:[#allocation3] sm:$0x1] %vm166, %v165
    // Predicated region
    $region22: #{simple_nn_forward.1} parent=1 // pred_check
      _
    $region23: #{simple_nn_forward.1} parent=1 // pred_check_branch
      %169 = sbr.rel (0) target = $region25
    $region24: #{simple_nn_forward.1} parent=1 // pred_region
      %s171 = ssub.s32 16, 16
      %172 = vsyncadd [#allocation4], %s171
      %s174 = sshll.u32 [#allocation3], 4
      %s175 = int_to_ptr.vmem [resolvable:$true] %s174
      %177 = dma.vmem_to_hbm [thread:$0]  %s175, 16, %s5, [#allocation4]
    $region25: #{simple_nn_forward.1} parent=1 // pred_fallthru
      _
    // Predicated region
    $region26: #{simple_nn_forward.1} parent=1 // pred_check
      _
    $region27: #{simple_nn_forward.1} parent=1 // pred_check_branch
      %179 = sbr.rel (0) target = $region29
    $region28: #{simple_nn_forward.1} parent=1 // pred_region
      %180 = dma.done [#allocation4], 16
    $region29: #{simple_nn_forward.1} parent=1 // pred_fallthru
      _
    %181 = vsyncpa [#allocation4], 1

</llo_original>
